<compile_context>
chip_gen: v5e
topology: v5e:2x2
jax: 0.10.0
libtpu: 0.0.40
codegen_flags: <defaults>
</compile_context>

<pallas_src>
import functools
import math

import jax
import jax.numpy as jnp
from jax.experimental import pallas as pl
from jax.experimental.pallas import tpu as pltpu

_LANE = 128
_SUBLANE = 8
# Target combined bytes (x + out + pe blocks, single-buffered) per grid step.
_TARGET_STEP_BYTES = 4 * 1024 * 1024
# Aim for at least this many grid steps when the input is large enough.
_MIN_STEPS = 8


def _ceil_div(a: int, b: int) -> int:
    return -(-a // b)


def _build_pe_table(d_model: int, max_seq_len: int) -> jnp.ndarray:
    """(max_seq_len + 1, d_model) float32, matching the PyTorch buffer."""
    pos = jnp.arange(max_seq_len + 1, dtype=jnp.float32)[:, None]   # (P, 1)
    idx = jnp.arange(d_model, dtype=jnp.float32)[None, :]           # (1, D)
    denom = jnp.power(jnp.float32(10000.0), 2.0 * idx / d_model)    # (1, D)
    arg = pos / denom                                                # (P, D)
    is_even = (jnp.arange(d_model) % 2 == 0)[None, :]
    return jnp.where(is_even, jnp.sin(arg), jnp.cos(arg)).astype(jnp.float32)


def _pos_enc_kernel_3d(x_ref, pe_ref, o_ref, *, scale):
    # x_ref: (ts, B, D), pe_ref: (ts, D) -> broadcast pe over the batch dim.
    x = x_ref[...].astype(jnp.float32)
    pe = pe_ref[...][:, None, :]
    o_ref[...] = (x * scale + pe).astype(o_ref.dtype)


def _pos_enc_kernel_flat(x_ref, pe_ref, o_ref, *, scale, batch):
    # x_ref: (ts, B*D), pe_ref: (ts, D) -> lane-tile pe across the B copies.
    x = x_ref[...].astype(jnp.float32)
    pe = jnp.tile(pe_ref[...], (1, batch))
    o_ref[...] = (x * scale + pe).astype(o_ref.dtype)


def _choose_seq_tile(S: int, step_row_bytes: int) -> int:
    """Seq-tile (multiple of 8, or S itself) targeting ~_TARGET_STEP_BYTES/step
    and at least _MIN_STEPS grid steps for large inputs."""
    if S * step_row_bytes <= _TARGET_STEP_BYTES:
        return S
    ts = max(_SUBLANE,
             (_TARGET_STEP_BYTES // max(step_row_bytes, 1)) // _SUBLANE * _SUBLANE)
    cap = max(_SUBLANE, (_ceil_div(S, _MIN_STEPS) // _SUBLANE) * _SUBLANE)
    ts = min(ts, cap)
    return S if ts >= S else ts


def _vmem_limit_bytes(per_step_bytes: int) -> int:
    """Scoped-VMEM limit: double-buffered blocks + headroom, capped at half of
    the chip's physical VMEM (generation-aware via get_tpu_info)."""
    try:
        cap = int(pltpu.get_tpu_info().vmem_capacity_bytes)
    except Exception:
        cap = 64 * 1024 * 1024          # assume the smallest (v7x per-TC) if query fails
    want = 2 * per_step_bytes + 8 * 1024 * 1024
    floor = 16 * 1024 * 1024
    ceiling = max(floor, cap // 2)
    return int(min(max(want, floor), ceiling))


def positional_encoder(x: jnp.ndarray, pe_table: jnp.ndarray, d_model: int) -> jnp.ndarray:
    """x: (S, B, D).  pe_table: (max_seq_len + 1, D) float32."""
    S, B, D = x.shape
    assert D == d_model
    assert pe_table.shape[0] >= S and pe_table.shape[1] == D

    scale = float(math.sqrt(d_model))
    itemsize = jnp.dtype(x.dtype).itemsize
    pe_used = pe_table[:S]                       # (S, D) float32

    # 3-D layout only when both the lane dim (D) is dense and the batch fills
    # the sublanes; otherwise flatten (B, D) -> B*D for dense vregs/stores.
    use_3d = (D % _LANE == 0) and (B >= _SUBLANE)

    if use_3d:
        step_row_bytes = 2 * B * D * itemsize + D * 4      # x + out + pe per seq row
        ts = _choose_seq_tile(S, step_row_bytes)
        grid = (_ceil_div(S, ts),)
        kernel = functools.partial(_pos_enc_kernel_3d, scale=scale)
        in_specs = [
            pl.BlockSpec((ts, B, D), lambda i: (i, 0, 0)),
            pl.BlockSpec((ts, D), lambda i: (i, 0)),
        ]
        out_specs = pl.BlockSpec((ts, B, D), lambda i: (i, 0, 0))
        x_op = x
        out_shape = jax.ShapeDtypeStruct((S, B, D), x.dtype)
        reshape_out = lambda o: o
    else:
        F = B * D
        x_op = x.reshape(S, F)                              # layout-preserving, free in XLA
        step_row_bytes = 2 * F * itemsize + D * 4
        ts = _choose_seq_tile(S, step_row_bytes)
        grid = (_ceil_div(S, ts),)
        kernel = functools.partial(_pos_enc_kernel_flat, scale=scale, batch=B)
        in_specs = [
            pl.BlockSpec((ts, F), lambda i: (i, 0)),
            pl.BlockSpec((ts, D), lambda i: (i, 0)),
        ]
        out_specs = pl.BlockSpec((ts, F), lambda i: (i, 0))
        out_shape = jax.ShapeDtypeStruct((S, F), x.dtype)
        reshape_out = lambda o: o.reshape(S, B, D)

    per_step_bytes = ts * step_row_bytes
    cost = pl.CostEstimate(
        flops=2 * S * B * D,                                 # one mul + one add / elem
        transcendentals=0,
        bytes_accessed=int(2 * S * B * D * itemsize          # read x + write out
                           + S * D * 4),                     # read pe once
    )

    out = pl.pallas_call(
        kernel,
        out_shape=out_shape,
        grid_spec=pltpu.PrefetchScalarGridSpec(
            num_scalar_prefetch=0,
            grid=grid,
            in_specs=in_specs,
            out_specs=out_specs,
        ),
        compiler_params=pltpu.CompilerParams(
            dimension_semantics=("parallel",),
            vmem_limit_bytes=_vmem_limit_bytes(per_step_bytes),
        ),
        cost_estimate=cost,
    )(x_op, pe_used)
    return reshape_out(out)


if __name__ == "__main__":
    rng = jax.random.PRNGKey(0)
    keys = jax.random.split(rng, 4)

    def run_and_check(S, B, d_model, max_seq_len, key):
        x = jax.random.normal(key, (S, B, d_model), dtype=jnp.float32)
        pe_table = _build_pe_table(d_model, max_seq_len)
        out = jax.block_until_ready(positional_encoder(x, pe_table, d_model))
        ref = x * jnp.float32(math.sqrt(d_model)) + pe_table[:S][:, None, :]
        assert out.shape == (S, B, d_model)
        assert jnp.allclose(out, ref, atol=1e-5, rtol=1e-5), (S, B, d_model)

    # Toy shape implied by the module (small D -> flattened path, grid=(1,)).
    run_and_check(S=8, B=2, d_model=32, max_seq_len=16, key=keys[0])
    # Lane-aligned D but small batch -> still flattened ((S, B*D) lane-dense).
    run_and_check(S=16, B=2, d_model=128, max_seq_len=32, key=keys[1])
    # Lane-aligned D, batch >= 8 -> 3-D path, pe broadcast over batch in-kernel.
    run_and_check(S=24, B=8, d_model=128, max_seq_len=32, key=keys[2])
    # Larger shape exercising the multi-step pipelined grid (~8 steps).
    run_and_check(S=256, B=8, d_model=256, max_seq_len=256, key=keys[3])

    print("KERNEL_OK")
</pallas_src>

<mosaic_0001>
module attributes {stable_mosaic.version = 11 : i64} {
  func.func @_pos_enc_kernel_flat(%arg0: i32, %arg1: memref<8x64xf32, #tpu.memory_space<vmem>>, %arg2: memref<8x32xf32, #tpu.memory_space<vmem>>, %arg3: memref<8x64xf32, #tpu.memory_space<vmem>>) attributes {dimension_semantics = [#tpu.dimension_semantics<parallel>], iteration_bounds = array<i64: 1>, scalar_prefetch = 0 : i64, scratch_operands = 0 : i64, tpu.core_type = #tpu.core_type<tc>, window_params = [{transform_indices = @transform_0, window_bounds = array<i64: 8, 64>}, {transform_indices = @transform_1, window_bounds = array<i64: 8, 32>}, {transform_indices = @transform_2, window_bounds = array<i64: 8, 64>}]} {
    %c0 = arith.constant 0 : index
    %c0_0 = arith.constant 0 : index
    %0 = vector.load %arg1[%c0, %c0_0] : memref<8x64xf32, #tpu.memory_space<vmem>>, vector<8x64xf32>
    %c0_1 = arith.constant 0 : index
    %c0_2 = arith.constant 0 : index
    %1 = vector.load %arg2[%c0_1, %c0_2] : memref<8x32xf32, #tpu.memory_space<vmem>>, vector<8x32xf32>
    %2 = tpu.concatenate %1, %1 in 1 : vector<8x32xf32>, vector<8x32xf32> -> vector<8x64xf32>
    %cst = arith.constant 5.65685415 : f32
    %3 = vector.broadcast %cst : f32 to vector<8x64xf32>
    %4 = arith.mulf %0, %3 : vector<8x64xf32>
    %5 = arith.addf %4, %2 : vector<8x64xf32>
    %c0_3 = arith.constant 0 : index
    %c0_4 = arith.constant 0 : index
    %6 = vector.load %arg3[%c0_3, %c0_4] : memref<8x64xf32, #tpu.memory_space<vmem>>, vector<8x64xf32>
    tpu.vector_store %arg3[%c0_3, %c0_4], %5 {strides = array<i32>} : memref<8x64xf32, #tpu.memory_space<vmem>>, vector<8x64xf32>,
    return
  }
  func.func @transform_0(%arg0: i32) -> (i32, i32) {
    %c0_i32 = arith.constant 0 : i32
    %c0_i32_0 = arith.constant 0 : i32
    return %arg0, %c0_i32 : i32, i32
  }
  func.func @transform_1(%arg0: i32) -> (i32, i32) {
    %c0_i32 = arith.constant 0 : i32
    %c0_i32_0 = arith.constant 0 : i32
    return %arg0, %c0_i32 : i32, i32
  }
  func.func @transform_2(%arg0: i32) -> (i32, i32) {
    %c0_i32 = arith.constant 0 : i32
    %c0_i32_0 = arith.constant 0 : i32
    return %arg0, %c0_i32 : i32, i32
  }
}

</mosaic_0001>

<llo_original>
// kernel: tpu_custom_call.1
$region0: #{tpu_custom_call.1}
  #allocation0 [shape = 'u32[]', space=smem, size = 0x4, offset = 0x4, fixed_abs, tag = 'smem constant byte address 0x4 - core index']
  #allocation1 [shape = 'u32[72,128]{1,0:T(1,128)}', space=vmem, size = 0x9000, scoped, tag = 'internal scratch']
  %s0 = inlined_call_operand.hbm [shape: f32[8,64], index: 0, kind: input, shape index: {}]
  %s1 = inlined_call_operand.hbm [shape: f32[8,32], index: 1, kind: input, shape index: {}]
  %s2 = inlined_call_operand.hbm [shape: f32[8,64], index: 2, kind: output, shape index: {}]
  %s3 = sld [smem:[#allocation0]]
  $region26: #{tpu_custom_call.1} parent=0
    _
  %s5 = ssub.s32 1, %s3
  %s6 = scalar_select 0, %s5, %s3
  $region1: #{tpu_custom_call.1} parent=0
    #allocation2 [shape = 'u8[4096]{0}', space=vmem, size = 0x1000, scoped, tag = 'input window, operand 0, single buffered']
    #allocation3 [shape = 's32[1]{0}', space=sflag, size = 0x4, scoped, tag = 'scoped memory for tpu_custom_call.1']
    #allocation4 [shape = 's32[1]{0}', space=sflag, size = 0x4, scoped, tag = 'scoped memory for tpu_custom_call.1']
    #allocation5 [shape = 'u8[4096]{0}', space=vmem, size = 0x1000, scoped, tag = 'input window, operand 1, single buffered']
    #allocation6 [shape = 's32[1]{0}', space=sflag, size = 0x4, scoped, tag = 'scoped memory for tpu_custom_call.1']
    #allocation7 [shape = 'u8[4096]{0}', space=vmem, size = 0x1000, scoped, tag = 'output window, operand 0, single buffered']
    %7 = vsyncpa [#allocation3], 0
    %8 = vsyncpa [#allocation6], 0
    %9 = vsyncpa [#allocation4], 0
    // Predicated region
    $region2: #{tpu_custom_call.1} parent=1 // pred_check
      _
    $region3: #{tpu_custom_call.1} parent=1 // pred_check_branch
      %11 = sbr.rel (0) target = $region5
    $region4: #{tpu_custom_call.1} parent=1 // pred_region
      %13 = vsyncadd [#allocation3], 0
      %s15 = sshll.u32 %s0, 4
      %s16 = int_to_ptr.hbm [resolvable:$true] %s15
      %s17 = sshll.u32 [#allocation2], 4
      %s18 = int_to_ptr.vmem [resolvable:$true] %s17
      %20 = dma.hbm_to_vmem [thread:$0]  %s16, 128, %s18, [#allocation3]
    $region5: #{tpu_custom_call.1} parent=1 // pred_fallthru
      _
    // Predicated region
    $region6: #{tpu_custom_call.1} parent=1 // pred_check
      _
    $region7: #{tpu_custom_call.1} parent=1 // pred_check_branch
      %22 = sbr.rel (0) target = $region9
    $region8: #{tpu_custom_call.1} parent=1 // pred_region
      %24 = vsyncadd [#allocation6], 0
      %s26 = sshll.u32 %s1, 4
      %s27 = int_to_ptr.hbm [resolvable:$true] %s26
      %s28 = sshll.u32 [#allocation5], 4
      %s29 = int_to_ptr.vmem [resolvable:$true] %s28
      %31 = dma.hbm_to_vmem [thread:$0]  %s27, 128, %s29, [#allocation6]
    $region9: #{tpu_custom_call.1} parent=1 // pred_fallthru
      _
    // Predicated region
    $region10: #{tpu_custom_call.1} parent=1 // pred_check
      _
    $region11: #{tpu_custom_call.1} parent=1 // pred_check_branch
      %33 = sbr.rel (0) target = $region13
    $region12: #{tpu_custom_call.1} parent=1 // pred_region
      %35 = dma.done [#allocation3], 128
    $region13: #{tpu_custom_call.1} parent=1 // pred_fallthru
      _
    // Predicated region
    $region14: #{tpu_custom_call.1} parent=1 // pred_check
      _
    $region15: #{tpu_custom_call.1} parent=1 // pred_check_branch
      %37 = sbr.rel (0) target = $region17
    $region16: #{tpu_custom_call.1} parent=1 // pred_region
      %39 = dma.done [#allocation6], 128
    $region17: #{tpu_custom_call.1} parent=1 // pred_fallthru
      _
    %v40 = vld [vmem:[#allocation2] sm:$0xff]
    %v41 = vld [vmem:[#allocation5] sm:$0xff]
    %43 = vrot.lane.b32.xlu0 %v41, 32
    %v44 = vpop.permute.xlu0 %43
    %vm46 = vcmask 261120
    %v47 = vsel %vm46, %v41, %v44
    %v48 = vmul.f32 %v40, 5.656854
    %v49 = vadd.f32 %v48, %v47
    %vm50 = vcmask 523264
    %51 = vst.msk [vmem:[#allocation7] sm:$0xff] %vm50, %v49
    // Predicated region
    $region18: #{tpu_custom_call.1} parent=1 // pred_check
      _
    $region19: #{tpu_custom_call.1} parent=1 // pred_check_branch
      %53 = sbr.rel (0) target = $region21
    $region20: #{tpu_custom_call.1} parent=1 // pred_region
      %55 = vsyncadd [#allocation4], 0
      %s57 = sshll.u32 [#allocation7], 4
      %s58 = int_to_ptr.vmem [resolvable:$true] %s57
      %s59 = sshll.u32 %s2, 4
      %s60 = int_to_ptr.hbm [resolvable:$true] %s59
      %62 = dma.vmem_to_hbm [thread:$0]  %s58, 128, %s60, [#allocation4]
    $region21: #{tpu_custom_call.1} parent=1 // pred_fallthru
      _
    // Predicated region
    $region22: #{tpu_custom_call.1} parent=1 // pred_check
      _
    $region23: #{tpu_custom_call.1} parent=1 // pred_check_branch
      %64 = sbr.rel (0) target = $region25
    $region24: #{tpu_custom_call.1} parent=1 // pred_region
      %66 = dma.done [#allocation4], 128
    $region25: #{tpu_custom_call.1} parent=1 // pred_fallthru
      _
    %67 = vsyncpa [#allocation3], 1
    %68 = vsyncpa [#allocation6], 1
    %69 = vsyncpa [#allocation4], 1

</llo_original>
